<compile_context>
chip_gen: v5e
topology: v5e:2x2
jax: 0.10.0
libtpu: 0.0.40
codegen_flags: <defaults>
</compile_context>

<pallas_src>
import jax
import jax.numpy as jnp
from jax.experimental import pallas as pl
from jax.experimental.pallas import tpu as pltpu


# ----------------------------------------------------------------------------
# Kernel: fc3(relu(fc2(relu(fc1(s))))) on pre-fused weights.
# Dueling vs. non-dueling differ only in the prepared weights, so one kernel
# serves both paths.
# ----------------------------------------------------------------------------
def _dot_bf16(x, w):
    """MXU-friendly matmul: bf16 inputs, f32 accumulation."""
    return jnp.dot(x.astype(jnp.bfloat16), w, preferred_element_type=jnp.float32)


def critic_mlp3_kernel(state_ref, w1_ref, b1_ref, w2_ref, b2_ref,
                       w3_ref, b3_ref, out_ref):
    x = state_ref[...]                                                # bf16 (TB, S)
    x1 = jnp.maximum(_dot_bf16(x, w1_ref[...]) + b1_ref[...], 0.0)    # f32 (TB, H1)
    h = jnp.maximum(_dot_bf16(x1, w2_ref[...]) + b2_ref[...], 0.0)    # f32 (TB, H2 | 2H2)
    out_ref[...] = _dot_bf16(h, w3_ref[...]) + b3_ref[...]            # f32 (TB, out_pad)


# TODO(synk): the PyTorch __init__ also defines a num_layer==3 variant, but
# forward() has no return path for it, so it is not implemented here.


# ----------------------------------------------------------------------------
# One-time parameter preparation (fusion, dueling fold, lane padding, bf16).
# ----------------------------------------------------------------------------
def _round_up(x, m):
    return (x + m - 1) // m * m


def prepare_params(params, *, num_action, atoms, dueling):
    """Build fused, bf16, lane-padded weights once (outside the hot loop)."""
    f32, bf16 = jnp.float32, jnp.bfloat16
    w1 = params["w1"].astype(bf16)
    b1 = params["b1"].astype(f32)

    if dueling == 1:
        H2 = params["w2"].shape[1]
        A, T = num_action, atoms
        AT = A * T
        out_pad = _round_up(AT, 128)

        # Fused fc2 / fc2_adv:  h = [x2 | x2_adv]
        w2f = jnp.concatenate([params["w2"], params["w2_adv"]], axis=1).astype(bf16)
        b2f = jnp.concatenate([params["b2"], params["b2_adv"]], axis=1).astype(f32)

        # Fold dueling combine q = v + a - mean_a into fc3 (f32 math, then bf16):
        #   top rows (x2 path):   tile(W3) across the A action groups
        #   bottom rows (x2_adv): W3_adv - per-atom group-mean over actions
        w3v = jnp.tile(params["w3"].astype(f32), (1, A))                      # (H2, AT)
        w3a = params["w3_adv"].astype(f32).reshape(H2, A, T)
        w3a_eff = (w3a - w3a.mean(axis=1, keepdims=True)).reshape(H2, AT)     # (H2, AT)
        w3q = jnp.concatenate([w3v, w3a_eff], axis=0)                         # (2H2, AT)

        b3v = jnp.tile(params["b3"].astype(f32), (1, A)).reshape(1, A, T)
        b3a = params["b3_adv"].astype(f32).reshape(1, A, T)
        b3q = (b3v + b3a - b3a.mean(axis=1, keepdims=True)).reshape(1, AT)

        w3p = jnp.zeros((2 * H2, out_pad), f32).at[:, :AT].set(w3q).astype(bf16)
        b3p = jnp.zeros((1, out_pad), f32).at[:, :AT].set(b3q)
        return {"w1": w1, "b1": b1, "w2": w2f, "b2": b2f, "w3": w3p, "b3": b3p,
                "out_width": AT, "out_pad": out_pad}

    # ---- non-dueling path: pad the num_action-wide head to 128 lanes ----
    H2 = params["w2"].shape[1]
    N = num_action
    out_pad = _round_up(N, 128)
    w2 = params["w2"].astype(bf16)
    b2 = params["b2"].astype(f32)
    w3p = (jnp.zeros((H2, out_pad), f32).at[:, :N]
           .set(params["w3"].astype(f32)).astype(bf16))
    b3p = jnp.zeros((1, out_pad), f32).at[:, :N].set(params["b3"].astype(f32))
    return {"w1": w1, "b1": b1, "w2": w2, "b2": b2, "w3": w3p, "b3": b3p,
            "out_width": N, "out_pad": out_pad}


# ----------------------------------------------------------------------------
# Forward wrapper
# ----------------------------------------------------------------------------
def _resident_spec(arr):
    """Weight/bias spec: full block, constant index -> stays resident in VMEM."""
    return pl.BlockSpec(arr.shape, lambda i: (0,) * arr.ndim)


def _pick_batch_tile(B, batch_tile):
    if B <= batch_tile:
        return B
    # >= 2 grid steps so ("parallel",) megacore sharding can use both v7x TCs,
    # TB kept a multiple of 8 for sublane alignment.
    return min(batch_tile, _round_up(pl.cdiv(B, 2), 8))


def critic_qr_forward(state, prepared, *, num_action, atoms, dueling,
                      batch_tile=512):
    """Pallas forward on prepared params (see prepare_params)."""
    B, S = state.shape
    TB = _pick_batch_tile(B, batch_tile)
    grid = (pl.cdiv(B, TB),)
    out_pad = prepared["out_pad"]
    out_width = prepared["out_width"]

    state_bf = state.astype(jnp.bfloat16)
    args = (state_bf, prepared["w1"], prepared["b1"], prepared["w2"],
            prepared["b2"], prepared["w3"], prepared["b3"])

    H1 = prepared["w1"].shape[1]
    H2m = prepared["w2"].shape[1]
    flops = 2 * B * (S * H1 + H1 * H2m + H2m * out_pad)
    bytes_accessed = int(state_bf.size * state_bf.dtype.itemsize
                         + B * out_pad * 4
                         + sum(int(a.size) * a.dtype.itemsize for a in args[1:]))

    out2d = pl.pallas_call(
        critic_mlp3_kernel,
        out_shape=jax.ShapeDtypeStruct((B, out_pad), jnp.float32),
        grid_spec=pltpu.PrefetchScalarGridSpec(
            num_scalar_prefetch=0,
            grid=grid,
            in_specs=[pl.BlockSpec((TB, S), lambda i: (i, 0))]
                     + [_resident_spec(a) for a in args[1:]],
            out_specs=pl.BlockSpec((TB, out_pad), lambda i: (i, 0)),
        ),
        compiler_params=pltpu.CompilerParams(
            dimension_semantics=("parallel",)),
        cost_estimate=pl.CostEstimate(flops=int(flops), transcendentals=0,
                                      bytes_accessed=bytes_accessed),
    )(*args)

    if dueling == 1:
        return out2d[:, :out_width].reshape(B, num_action, atoms)
    return out2d[:, :out_width]


# ----------------------------------------------------------------------------
# Deterministic parameter construction (PyTorch nn.Linear-style uniform init)
# ----------------------------------------------------------------------------
def _linear_params(key, fan_in, fan_out):
    kw, kb = jax.random.split(key)
    bound = 1.0 / jnp.sqrt(jnp.float32(fan_in))
    w = jax.random.uniform(kw, (fan_in, fan_out), jnp.float32, -bound, bound)
    b = jax.random.uniform(kb, (1, fan_out), jnp.float32, -bound, bound)
    return w, b


def make_params(key, state_dim, num_action, h1, h2, atoms):
    ks = jax.random.split(key, 6)
    w1, b1 = _linear_params(ks[0], state_dim, h1)
    w2, b2 = _linear_params(ks[1], h1, h2)
    w3, b3 = _linear_params(ks[2], h2, atoms)              # dueling: fc3 -> atoms
    w2a, b2a = _linear_params(ks[3], h1, h2)
    w3a, b3a = _linear_params(ks[4], h2, num_action * atoms)
    w3p, b3p = _linear_params(ks[5], h2, num_action)       # non-dueling fc3 -> num_action
    return {"w1": w1, "b1": b1, "w2": w2, "b2": b2,
            "w3": w3, "b3": b3, "w2_adv": w2a, "b2_adv": b2a,
            "w3_adv": w3a, "b3_adv": b3a,
            "w3_plain": w3p, "b3_plain": b3p}


# ----------------------------------------------------------------------------
# Pure-JAX reference (mirrors the PyTorch forward; same bf16-in / f32-acc dots)
# ----------------------------------------------------------------------------
def reference_forward(state, p, *, num_action, atoms, dueling):
    def lin(x, w, b):
        return jnp.dot(x.astype(jnp.bfloat16), w.astype(jnp.bfloat16),
                       preferred_element_type=jnp.float32) + b

    x1 = jax.nn.relu(lin(state, p["w1"], p["b1"]))
    x2 = jax.nn.relu(lin(x1, p["w2"], p["b2"]))
    if dueling == 1:
        x2a = jax.nn.relu(lin(x1, p["w2_adv"], p["b2_adv"]))
        x3a = lin(x2a, p["w3_adv"], p["b3_adv"])
        x3 = lin(x2, p["w3"], p["b3"])
        v = x3.reshape(-1, 1, atoms)
        a = x3a.reshape(-1, num_action, atoms)
        return v + a - a.mean(axis=1, keepdims=True)
    return lin(x2, p["w3_plain"], p["b3_plain"])


# ----------------------------------------------------------------------------
if __name__ == "__main__":
    # Small, forward-consistent shapes.
    B, state_dim, num_action = 8, 16, 4
    h1, h2, atoms = 32, 32, 8

    key = jax.random.PRNGKey(0)
    k_state, k_params, k_big = jax.random.split(key, 3)
    state = jax.random.normal(k_state, (B, state_dim), jnp.float32)
    params = make_params(k_params, state_dim, num_action, h1, h2, atoms)

    # ---- Dueling (quantile-regression) path ----
    prep_d = prepare_params(params, num_action=num_action, atoms=atoms, dueling=1)
    q = critic_qr_forward(state, prep_d, num_action=num_action,
                          atoms=atoms, dueling=1)
    q = jax.block_until_ready(q)
    q_ref = reference_forward(state, params, num_action=num_action,
                              atoms=atoms, dueling=1)
    assert q.shape == (B, num_action, atoms)
    assert jnp.allclose(q, q_ref, atol=1e-2, rtol=1e-2), (
        float(jnp.max(jnp.abs(q - q_ref))))

    # ---- Non-dueling path ----
    plain_params = dict(params)
    plain_params["w3"], plain_params["b3"] = params["w3_plain"], params["b3_plain"]
    prep_p = prepare_params(plain_params, num_action=num_action,
                            atoms=atoms, dueling=0)
    y = critic_qr_forward(state, prep_p, num_action=num_action,
                          atoms=atoms, dueling=0)
    y = jax.block_until_ready(y)
    y_ref = reference_forward(state, params, num_action=num_action,
                              atoms=atoms, dueling=0)
    assert y.shape == (B, num_action)
    assert jnp.allclose(y, y_ref, atol=1e-2, rtol=1e-2), (
        float(jnp.max(jnp.abs(y - y_ref))))

    # ---- Multi-step grid path (grid > 1, padded tail block) ----
    B2 = 528
    state_big = jax.random.normal(k_big, (B2, state_dim), jnp.float32)
    q_big = critic_qr_forward(state_big, prep_d, num_action=num_action,
                              atoms=atoms, dueling=1, batch_tile=256)
    q_big = jax.block_until_ready(q_big)
    q_big_ref = reference_forward(state_big, params, num_action=num_action,
                                  atoms=atoms, dueling=1)
    assert q_big.shape == (B2, num_action, atoms)
    assert jnp.allclose(q_big, q_big_ref, atol=1e-2, rtol=1e-2), (
        float(jnp.max(jnp.abs(q_big - q_big_ref))))

    print("KERNEL_OK")
</pallas_src>

<mosaic_0001>
module attributes {stable_mosaic.version = 11 : i64} {
  func.func @critic_mlp3_kernel(%arg0: i32, %arg1: memref<8x16xbf16, #tpu.memory_space<vmem>>, %arg2: memref<16x32xbf16, #tpu.memory_space<vmem>>, %arg3: memref<1x32xf32, #tpu.memory_space<vmem>>, %arg4: memref<32x64xbf16, #tpu.memory_space<vmem>>, %arg5: memref<1x64xf32, #tpu.memory_space<vmem>>, %arg6: memref<64x128xbf16, #tpu.memory_space<vmem>>, %arg7: memref<1x128xf32, #tpu.memory_space<vmem>>, %arg8: memref<8x128xf32, #tpu.memory_space<vmem>>) attributes {dimension_semantics = [#tpu.dimension_semantics<parallel>], iteration_bounds = array<i64: 1>, scalar_prefetch = 0 : i64, scratch_operands = 0 : i64, tpu.core_type = #tpu.core_type<tc>, window_params = [{transform_indices = @transform_0, window_bounds = array<i64: 8, 16>}, {pipeline_mode = #tpu.pipeline_mode<synchronous>, transform_indices = @transform_1, window_bounds = array<i64: 16, 32>}, {pipeline_mode = #tpu.pipeline_mode<synchronous>, transform_indices = @transform_2, window_bounds = array<i64: 1, 32>}, {pipeline_mode = #tpu.pipeline_mode<synchronous>, transform_indices = @transform_3, window_bounds = array<i64: 32, 64>}, {pipeline_mode = #tpu.pipeline_mode<synchronous>, transform_indices = @transform_4, window_bounds = array<i64: 1, 64>}, {pipeline_mode = #tpu.pipeline_mode<synchronous>, transform_indices = @transform_5, window_bounds = array<i64: 64, 128>}, {pipeline_mode = #tpu.pipeline_mode<synchronous>, transform_indices = @transform_6, window_bounds = array<i64: 1, 128>}, {transform_indices = @transform_7, window_bounds = array<i64: 8, 128>}]} {
    %c0 = arith.constant 0 : index
    %c0_0 = arith.constant 0 : index
    %0 = vector.load %arg1[%c0, %c0_0] : memref<8x16xbf16, #tpu.memory_space<vmem>>, vector<8x16xbf16>
    %c0_1 = arith.constant 0 : index
    %c0_2 = arith.constant 0 : index
    %1 = vector.load %arg2[%c0_1, %c0_2] : memref<16x32xbf16, #tpu.memory_space<vmem>>, vector<16x32xbf16>
    %cst = arith.constant dense<0.000000e+00> : vector<8x32xf32>
    %2 = tpu.matmul %0, %1, %cst {dimension_numbers = #tpu.dot_dimension_numbers<[1], [0], [0], [1], [0, 0, 1, 1], [], []>} : vector<8x16xbf16>, vector<16x32xbf16>, vector<8x32xf32> -> vector<8x32xf32>
    %c0_3 = arith.constant 0 : index
    %c0_4 = arith.constant 0 : index
    %3 = vector.load %arg3[%c0_3, %c0_4] : memref<1x32xf32, #tpu.memory_space<vmem>>, vector<1x32xf32>
    %4 = vector.broadcast %3 : vector<1x32xf32> to vector<8x32xf32>
    %5 = arith.addf %2, %4 : vector<8x32xf32>
    %cst_5 = arith.constant 0.000000e+00 : f32
    %6 = vector.broadcast %cst_5 : f32 to vector<8x32xf32>
    %7 = arith.maximumf %5, %6 : vector<8x32xf32>
    %c0_6 = arith.constant 0 : index
    %c0_7 = arith.constant 0 : index
    %8 = vector.load %arg4[%c0_6, %c0_7] : memref<32x64xbf16, #tpu.memory_space<vmem>>, vector<32x64xbf16>
    %9 = arith.truncf %7 : vector<8x32xf32> to vector<8x32xbf16>
    %cst_8 = arith.constant dense<0.000000e+00> : vector<8x64xf32>
    %10 = tpu.matmul %9, %8, %cst_8 {dimension_numbers = #tpu.dot_dimension_numbers<[1], [0], [0], [1], [0, 0, 1, 1], [], []>} : vector<8x32xbf16>, vector<32x64xbf16>, vector<8x64xf32> -> vector<8x64xf32>
    %c0_9 = arith.constant 0 : index
    %c0_10 = arith.constant 0 : index
    %11 = vector.load %arg5[%c0_9, %c0_10] : memref<1x64xf32, #tpu.memory_space<vmem>>, vector<1x64xf32>
    %12 = vector.broadcast %11 : vector<1x64xf32> to vector<8x64xf32>
    %13 = arith.addf %10, %12 : vector<8x64xf32>
    %cst_11 = arith.constant 0.000000e+00 : f32
    %14 = vector.broadcast %cst_11 : f32 to vector<8x64xf32>
    %15 = arith.maximumf %13, %14 : vector<8x64xf32>
    %c0_12 = arith.constant 0 : index
    %c0_13 = arith.constant 0 : index
    %16 = vector.load %arg6[%c0_12, %c0_13] : memref<64x128xbf16, #tpu.memory_space<vmem>>, vector<64x128xbf16>
    %17 = arith.truncf %15 : vector<8x64xf32> to vector<8x64xbf16>
    %cst_14 = arith.constant dense<0.000000e+00> : vector<8x128xf32>
    %18 = tpu.matmul %17, %16, %cst_14 {dimension_numbers = #tpu.dot_dimension_numbers<[1], [0], [0], [1], [0, 0, 1, 1], [], []>} : vector<8x64xbf16>, vector<64x128xbf16>, vector<8x128xf32> -> vector<8x128xf32>
    %c0_15 = arith.constant 0 : index
    %c0_16 = arith.constant 0 : index
    %19 = vector.load %arg7[%c0_15, %c0_16] : memref<1x128xf32, #tpu.memory_space<vmem>>, vector<1x128xf32>
    %20 = vector.broadcast %19 : vector<1x128xf32> to vector<8x128xf32>
    %21 = arith.addf %18, %20 : vector<8x128xf32>
    %c0_17 = arith.constant 0 : index
    %c0_18 = arith.constant 0 : index
    %22 = vector.load %arg8[%c0_17, %c0_18] : memref<8x128xf32, #tpu.memory_space<vmem>>, vector<8x128xf32>
    tpu.vector_store %arg8[%c0_17, %c0_18], %21 {strides = array<i32>} : memref<8x128xf32, #tpu.memory_space<vmem>>, vector<8x128xf32>,
    return
  }
  func.func @transform_0(%arg0: i32) -> (i32, i32) {
    %c0_i32 = arith.constant 0 : i32
    %c0_i32_0 = arith.constant 0 : i32
    return %arg0, %c0_i32 : i32, i32
  }
  func.func @transform_1(%arg0: i32) -> (i32, i32) {
    %c0_i32 = arith.constant 0 : i32
    %c0_i32_0 = arith.constant 0 : i32
    %c0_i32_1 = arith.constant 0 : i32
    return %c0_i32, %c0_i32_0 : i32, i32
  }
  func.func @transform_2(%arg0: i32) -> (i32, i32) {
    %c0_i32 = arith.constant 0 : i32
    %c0_i32_0 = arith.constant 0 : i32
    %c0_i32_1 = arith.constant 0 : i32
    return %c0_i32, %c0_i32_0 : i32, i32
  }
  func.func @transform_3(%arg0: i32) -> (i32, i32) {
    %c0_i32 = arith.constant 0 : i32
    %c0_i32_0 = arith.constant 0 : i32
    %c0_i32_1 = arith.constant 0 : i32
    return %c0_i32, %c0_i32_0 : i32, i32
  }
  func.func @transform_4(%arg0: i32) -> (i32, i32) {
    %c0_i32 = arith.constant 0 : i32
    %c0_i32_0 = arith.constant 0 : i32
    %c0_i32_1 = arith.constant 0 : i32
    return %c0_i32, %c0_i32_0 : i32, i32
  }
  func.func @transform_5(%arg0: i32) -> (i32, i32) {
    %c0_i32 = arith.constant 0 : i32
    %c0_i32_0 = arith.constant 0 : i32
    %c0_i32_1 = arith.constant 0 : i32
    return %c0_i32, %c0_i32_0 : i32, i32
  }
  func.func @transform_6(%arg0: i32) -> (i32, i32) {
    %c0_i32 = arith.constant 0 : i32
    %c0_i32_0 = arith.constant 0 : i32
    %c0_i32_1 = arith.constant 0 : i32
    return %c0_i32, %c0_i32_0 : i32, i32
  }
  func.func @transform_7(%arg0: i32) -> (i32, i32) {
    %c0_i32 = arith.constant 0 : i32
    %c0_i32_0 = arith.constant 0 : i32
    return %arg0, %c0_i32 : i32, i32
  }
}

</mosaic_0001>

<llo_original>
// kernel: tpu_custom_call.1
$region0: #{tpu_custom_call.1}
  #allocation0 [shape = 'u32[]', space=smem, size = 0x4, offset = 0x4, fixed_abs, tag = 'smem constant byte address 0x4 - core index']
  #allocation1 [shape = 'u32[72,128]{1,0:T(1,128)}', space=vmem, size = 0x9000, scoped, tag = 'internal scratch']
  %s0 = inlined_call_operand.hbm [shape: bf16[8,16], index: 0, kind: input, shape index: {}]
  %s1 = inlined_call_operand.hbm [shape: bf16[16,32], index: 1, kind: input, shape index: {}]
  %s2 = inlined_call_operand.vmem [shape: f32[1,32], index: 2, kind: input, shape index: {}]
  %s3 = inlined_call_operand.hbm [shape: bf16[32,64], index: 3, kind: input, shape index: {}]
  %s4 = inlined_call_operand.vmem [shape: f32[1,64], index: 4, kind: input, shape index: {}]
  %s5 = inlined_call_operand.hbm [shape: bf16[64,128], index: 5, kind: input, shape index: {}]
  %s6 = inlined_call_operand.vmem [shape: f32[1,128], index: 6, kind: input, shape index: {}]
  %s7 = inlined_call_operand.hbm [shape: f32[8,128], index: 7, kind: output, shape index: {}]
  %s8 = sld [smem:[#allocation0]]
  $region54: #{tpu_custom_call.1} parent=0
    _
  %s10 = ssub.s32 1, %s8
  %s11 = scalar_select 0, %s10, %s8
  $region1: #{tpu_custom_call.1} parent=0
    #allocation2 [shape = 'u8[2048]{0}', space=vmem, size = 0x800, scoped, tag = 'input window, operand 0, single buffered']
    #allocation3 [shape = 's32[1]{0}', space=sflag, size = 0x4, scoped, tag = 'scoped memory for tpu_custom_call.1']
    #allocation4 [shape = 's32[1]{0}', space=sflag, size = 0x4, scoped, tag = 'scoped memory for tpu_custom_call.1']
    #allocation5 [shape = 'u8[4096]{0}', space=vmem, size = 0x1000, scoped, tag = 'input window, operand 1, single buffered']
    #allocation6 [shape = 's32[1]{0}', space=sflag, size = 0x4, scoped, tag = 'scoped memory for tpu_custom_call.1']
    #allocation7 [shape = 'u8[8192]{0}', space=vmem, size = 0x2000, scoped, tag = 'input window, operand 3, single buffered']
    #allocation8 [shape = 'u8[16384]{0}', space=vmem, size = 0x4000, scoped, tag = 'input window, operand 5, single buffered']
    #allocation9 [shape = 's32[1]{0}', space=sflag, size = 0x4, scoped, tag = 'scoped memory for tpu_custom_call.1']
    #allocation10 [shape = 'u8[4096]{0}', space=vmem, size = 0x1000, scoped, tag = 'output window, operand 0, single buffered']
    %12 = vsyncpa [#allocation3], 0
    %13 = vsyncpa [#allocation6], 0
    %14 = vsyncpa [#allocation9], 0
    %15 = vsyncpa [#allocation4], 0
    // Predicated region
    $region2: #{tpu_custom_call.1} parent=1 // pred_check
      _
    $region3: #{tpu_custom_call.1} parent=1 // pred_check_branch
      %17 = sbr.rel (0) target = $region5
    $region4: #{tpu_custom_call.1} parent=1 // pred_region
      %19 = vsyncadd [#allocation3], 0
      %s21 = sshll.u32 %s0, 4
      %s22 = int_to_ptr.hbm [resolvable:$true] %s21
      %s23 = sshll.u32 [#allocation2], 4
      %s24 = int_to_ptr.vmem [resolvable:$true] %s23
      %26 = dma.hbm_to_vmem [thread:$0]  %s22, 64, %s24, [#allocation3]
    $region5: #{tpu_custom_call.1} parent=1 // pred_fallthru
      _
    // Predicated region
    $region6: #{tpu_custom_call.1} parent=1 // pred_check
      _
    $region7: #{tpu_custom_call.1} parent=1 // pred_check_branch
      %28 = sbr.rel (0) target = $region9
    $region8: #{tpu_custom_call.1} parent=1 // pred_region
      %30 = vsyncadd [#allocation6], 0
      %s31 = sshll.u32 %s1, 4
      %s32 = int_to_ptr.hbm [resolvable:$true] %s31
      %s33 = sshll.u32 [#allocation5], 4
      %s34 = int_to_ptr.vmem [resolvable:$true] %s33
      %39 = dma.hbm_to_vmem [thread:$0]  %s32, 128, %s34, [#allocation6], 64, 64, 4
    $region9: #{tpu_custom_call.1} parent=1 // pred_fallthru
      _
    // Predicated region
    $region10: #{tpu_custom_call.1} parent=1 // pred_check
      _
    $region11: #{tpu_custom_call.1} parent=1 // pred_check_branch
      %41 = sbr.rel (0) target = $region13
    $region12: #{tpu_custom_call.1} parent=1 // pred_region
      _
    $region13: #{tpu_custom_call.1} parent=1 // pred_fallthru
      _
    // Predicated region
    $region14: #{tpu_custom_call.1} parent=1 // pred_check
      _
    $region15: #{tpu_custom_call.1} parent=1 // pred_check_branch
      %43 = sbr.rel (0) target = $region17
    $region16: #{tpu_custom_call.1} parent=1 // pred_region
      %45 = vsyncadd [#allocation6], 0
      %s46 = sshll.u32 %s3, 4
      %s47 = int_to_ptr.hbm [resolvable:$true] %s46
      %s48 = sshll.u32 [#allocation7], 4
      %s49 = int_to_ptr.vmem [resolvable:$true] %s48
      %54 = dma.hbm_to_vmem [thread:$0]  %s47, 256, %s49, [#allocation6], 64, 64, 4
    $region17: #{tpu_custom_call.1} parent=1 // pred_fallthru
      _
    // Predicated region
    $region18: #{tpu_custom_call.1} parent=1 // pred_check
      _
    $region19: #{tpu_custom_call.1} parent=1 // pred_check_branch
      %56 = sbr.rel (0) target = $region21
    $region20: #{tpu_custom_call.1} parent=1 // pred_region
      _
    $region21: #{tpu_custom_call.1} parent=1 // pred_fallthru
      _
    // Predicated region
    $region22: #{tpu_custom_call.1} parent=1 // pred_check
      _
    $region23: #{tpu_custom_call.1} parent=1 // pred_check_branch
      %58 = sbr.rel (0) target = $region25
    $region24: #{tpu_custom_call.1} parent=1 // pred_region
      %60 = vsyncadd [#allocation9], 0
      %s61 = sshll.u32 %s5, 4
      %s62 = int_to_ptr.hbm [resolvable:$true] %s61
      %s63 = sshll.u32 [#allocation8], 4
      %s64 = int_to_ptr.vmem [resolvable:$true] %s63
      %69 = dma.hbm_to_vmem [thread:$0]  %s62, 512, %s64, [#allocation9], 64, 64, 4
    $region25: #{tpu_custom_call.1} parent=1 // pred_fallthru
      _
    // Predicated region
    $region26: #{tpu_custom_call.1} parent=1 // pred_check
      _
    $region27: #{tpu_custom_call.1} parent=1 // pred_check_branch
      %71 = sbr.rel (0) target = $region29
    $region28: #{tpu_custom_call.1} parent=1 // pred_region
      _
    $region29: #{tpu_custom_call.1} parent=1 // pred_fallthru
      _
    // Predicated region
    $region30: #{tpu_custom_call.1} parent=1 // pred_check
      _
    $region31: #{tpu_custom_call.1} parent=1 // pred_check_branch
      %73 = sbr.rel (0) target = $region33
    $region32: #{tpu_custom_call.1} parent=1 // pred_region
      %75 = dma.done [#allocation3], 64
    $region33: #{tpu_custom_call.1} parent=1 // pred_fallthru
      _
    // Predicated region
    $region34: #{tpu_custom_call.1} parent=1 // pred_check
      _
    $region35: #{tpu_custom_call.1} parent=1 // pred_check_branch
      %77 = sbr.rel (0) target = $region37
    $region36: #{tpu_custom_call.1} parent=1 // pred_region
      %79 = dma.done [#allocation6], 128
    $region37: #{tpu_custom_call.1} parent=1 // pred_fallthru
      _
    // Predicated region
    $region38: #{tpu_custom_call.1} parent=1 // pred_check
      _
    $region39: #{tpu_custom_call.1} parent=1 // pred_check_branch
      %81 = sbr.rel (0) target = $region41
    $region40: #{tpu_custom_call.1} parent=1 // pred_region
      %83 = dma.done [#allocation6], 256
    $region41: #{tpu_custom_call.1} parent=1 // pred_fallthru
      _
    // Predicated region
    $region42: #{tpu_custom_call.1} parent=1 // pred_check
      _
    $region43: #{tpu_custom_call.1} parent=1 // pred_check_branch
      %85 = sbr.rel (0) target = $region45
    $region44: #{tpu_custom_call.1} parent=1 // pred_region
      %87 = dma.done [#allocation9], 512
    $region45: #{tpu_custom_call.1} parent=1 // pred_fallthru
      _
    %v89 = vld [vmem:[#allocation2] sm:$0xf]
    %v90 = vld [vmem:[#allocation5] sm:$0xf]
    %v91 = vld [vmem:[#allocation5 + $0x4] sm:$0xf]
    %v92 = vld [vmem:[%s2] sm:$0x1]
    %v94 = vperm.slane %v92, 0
    %v98 = vunpack.c.l.b16 %v90
    %v99 = vunpack.c.l.b16 %v91
    %v100 = vpack.c.b16 %v99, %v98
    %vm102 = vcmask 130048
    %v104 = vsel %vm102, %v89, 0
    %106 = vmatpush.bf16.msra.mxu0 0
    %107 = vmatpush.bf16.msra.mxu0 0
    %108 = vmatpush.bf16.msra.mxu0 0
    %109 = vmatpush.bf16.msra.mxu0 0
    %110 = vmatpush.bf16.msra.mxu0 0
    %111 = vmatpush.bf16.msra.mxu0 0
    %112 = vmatpush.bf16.msra.mxu0 0
    %113 = vmatpush.bf16.msra.mxu0 %v100
    %114 = vmatmul.bf16.gmra.mxu0 %v104
    %v115 = vpop.f32.mrf.mxu0
    %v116 = vadd.f32 %v94, %v115
    %v117 = vpop.f32.mrf.mxu0
    %118 = vdwg.mxu0
    %v119 = vmax.f32 %v116, 0.0
    %v120 = vld [vmem:[#allocation7] sm:$0xf]
    %v121 = vld [vmem:[#allocation7 + $0x4] sm:$0xf]
    %v122 = vld [vmem:[#allocation7 + $0x8] sm:$0xf]
    %v123 = vld [vmem:[#allocation7 + $0xc] sm:$0xf]
    %v124 = vpack.c.bf16 %v119, %v119
    %v125 = vld [vmem:[%s4] sm:$0x1]
    %v127 = vperm.slane %v125, 0
    %v133 = vunpack.c.l.b16 %v120
    %v134 = vunpack.c.l.b16 %v121
    %v135 = vunpack.c.l.b16 %v122
    %v136 = vunpack.c.l.b16 %v123
    %v137 = vpack.c.b16 %v134, %v133
    %v138 = vpack.c.b16 %v136, %v135
    %vm141 = vcmask 261120
    %v143 = vsel %vm141, %v124, 0
    %145 = vmatpush.bf16.msra.mxu0 0
    %146 = vmatpush.bf16.msra.mxu0 0
    %147 = vmatpush.bf16.msra.mxu0 0
    %148 = vmatpush.bf16.msra.mxu0 0
    %149 = vmatpush.bf16.msra.mxu0 0
    %150 = vmatpush.bf16.msra.mxu0 0
    %151 = vmatpush.bf16.msra.mxu0 %v138
    %152 = vmatpush.bf16.msra.mxu0 %v137
    %153 = vmatmul.bf16.gmra.mxu0 %v143
    %v154 = vpop.f32.mrf.mxu0
    %v155 = vadd.f32 %v127, %v154
    %v156 = vpop.f32.mrf.mxu0
    %157 = vdwg.mxu0
    %v158 = vmax.f32 %v155, 0.0
    %v159 = vld [vmem:[#allocation8] sm:$0xf]
    %v160 = vld [vmem:[#allocation8 + $0x4] sm:$0xf]
    %v161 = vld [vmem:[#allocation8 + $0x8] sm:$0xf]
    %v162 = vld [vmem:[#allocation8 + $0xc] sm:$0xf]
    %v163 = vld [vmem:[#allocation8 + $0x10] sm:$0xf]
    %v164 = vld [vmem:[#allocation8 + $0x14] sm:$0xf]
    %v165 = vld [vmem:[#allocation8 + $0x18] sm:$0xf]
    %v166 = vld [vmem:[#allocation8 + $0x1c] sm:$0xf]
    %v167 = vpack.c.bf16 %v158, %v158
    %v168 = vld [vmem:[%s6] sm:$0x1]
    %v170 = vperm.slane %v168, 0
    %v180 = vunpack.c.l.b16 %v159
    %v181 = vunpack.c.l.b16 %v160
    %v182 = vunpack.c.l.b16 %v161
    %v183 = vunpack.c.l.b16 %v162
    %v184 = vunpack.c.l.b16 %v163
    %v185 = vunpack.c.l.b16 %v164
    %v186 = vunpack.c.l.b16 %v165
    %v187 = vunpack.c.l.b16 %v166
    %v188 = vpack.c.b16 %v181, %v180
    %v189 = vpack.c.b16 %v183, %v182
    %v190 = vpack.c.b16 %v185, %v184
    %v191 = vpack.c.b16 %v187, %v186
    %vm196 = vcmask 523264
    %v198 = vsel %vm196, %v167, 0
    %200 = vmatpush.bf16.msra.mxu0 0
    %201 = vmatpush.bf16.msra.mxu0 0
    %202 = vmatpush.bf16.msra.mxu0 0
    %203 = vmatpush.bf16.msra.mxu0 0
    %204 = vmatpush.bf16.msra.mxu0 %v191
    %205 = vmatpush.bf16.msra.mxu0 %v190
    %206 = vmatpush.bf16.msra.mxu0 %v189
    %207 = vmatpush.bf16.msra.mxu0 %v188
    %208 = vmatmul.bf16.gmra.mxu0 %v198
    %v209 = vpop.f32.mrf.mxu0
    %v210 = vadd.f32 %v170, %v209
    %v211 = vpop.f32.mrf.mxu0
    %212 = vdwg.mxu0
    %213 = vst [vmem:[#allocation10] sm:$0xff] %v210
    // Predicated region
    $region46: #{tpu_custom_call.1} parent=1 // pred_check
      _
    $region47: #{tpu_custom_call.1} parent=1 // pred_check_branch
      %215 = sbr.rel (0) target = $region49
    $region48: #{tpu_custom_call.1} parent=1 // pred_region
      %217 = vsyncadd [#allocation4], 0
      %s219 = sshll.u32 [#allocation10], 4
      %s220 = int_to_ptr.vmem [resolvable:$true] %s219
      %s221 = sshll.u32 %s7, 4
      %s222 = int_to_ptr.hbm [resolvable:$true] %s221
      %224 = dma.vmem_to_hbm [thread:$0]  %s220, 128, %s222, [#allocation4]
    $region49: #{tpu_custom_call.1} parent=1 // pred_fallthru
      _
    // Predicated region
    $region50: #{tpu_custom_call.1} parent=1 // pred_check
      _
    $region51: #{tpu_custom_call.1} parent=1 // pred_check_branch
      %226 = sbr.rel (0) target = $region53
    $region52: #{tpu_custom_call.1} parent=1 // pred_region
      %228 = dma.done [#allocation4], 128
    $region53: #{tpu_custom_call.1} parent=1 // pred_fallthru
      _
    %229 = vsyncpa [#allocation3], 1
    %230 = vsyncpa [#allocation6], 1
    %231 = vsyncpa [#allocation9], 1
    %232 = vsyncpa [#allocation4], 1

</llo_original>
